<compile_context>
chip_gen: v6e
topology: v6e:2x2x1
jax: 0.10.0
libtpu: 0.0.40
codegen_flags: <defaults>
</compile_context>

<pallas_src>
import jax
import jax.numpy as jnp
from jax import lax
from jax.experimental import pallas as pl
from jax.experimental.pallas import tpu as pltpu

INPUT_SIZE = 64   # D  (embedding dim, = self.input_size)
RNN_SIZE = 64     # H  (LSTM hidden,   = self.rnn_size)


def _inst_encoder_kernel(x_ref, wih_ref, bias_ref, whh_ref, h_out_ref, xz_ref):
    """Whole-sequence LSTM recurrence in a single kernel invocation.

    x_ref     : VMEM (T*B, D)  f32   gathered embeddings, time-major flattened
    wih_ref   : VMEM (D, 4H)   f32   W_ih^T, gate columns in PyTorch order
    bias_ref  : VMEM (1, 4H)   f32   b_ih + b_hh
    whh_ref   : VMEM (H, 4H)   f32   W_hh^T
    h_out_ref : VMEM (B, H)    f32   final hidden state
    xz_ref    : VMEM (T*B, 4H) f32   scratch: precomputed x-side gate inputs
    """
    B, H = h_out_ref.shape
    TB, _ = x_ref.shape
    T = TB // B

    # ---- (1) Parallel part, off the serial path: x @ W_ih + bias for every
    # timestep as ONE matmul, results parked in VMEM scratch.
    xz_ref[...] = (
        jnp.dot(x_ref[...], wih_ref[...], preferred_element_type=jnp.float32)
        + bias_ref[...]
    )

    # ---- (2) Serial recurrence: only h_prev @ W_hh on the critical path.
    def step(t, carry):
        h_prev, c_prev = carry                              # (B, H) each
        # Precomputed x-side contribution for this timestep.
        x_gates = xz_ref[pl.ds(t * B, B), :]                # (B, 4H)
        gates = x_gates + jnp.dot(
            h_prev, whh_ref[...], preferred_element_type=jnp.float32)

        # Natural 64-wide gate slices, PyTorch order (i, f, g, o).
        i_g = jax.nn.sigmoid(gates[:, 0 * H:1 * H])
        f_g = jax.nn.sigmoid(gates[:, 1 * H:2 * H])
        g_g = jnp.tanh(gates[:, 2 * H:3 * H])
        o_g = jax.nn.sigmoid(gates[:, 3 * H:4 * H])

        c_new = f_g * c_prev + i_g * g_g
        h_new = o_g * jnp.tanh(c_new)
        return (h_new, c_new)

    h0 = jnp.zeros((B, H), jnp.float32)
    c0 = jnp.zeros((B, H), jnp.float32)
    h_fin, _ = lax.fori_loop(0, T, step, (h0, c0), unroll=True)

    h_out_ref[...] = h_fin


@jax.jit
def inst_encoder_forward(inst, params):
    """Pallas implementation of InstEncoder.forward.

    inst   : (B, T) int32 token ids in [0, vocab_size]
    params : dict with 'embed' (V+1, D), 'w_ih' (4H, D), 'w_hh' (4H, H),
             'b_ih' (4H,), 'b_hh' (4H,)
    returns: (B, H) float32 final hidden state
    """
    B, T = inst.shape
    D, H = INPUT_SIZE, RNN_SIZE

    # Embedding gather in the wrapper (off the serial path; keeps the table
    # out of VMEM).  mode="clip" guards against out-of-range token ids.
    embed = params["embed"].astype(jnp.float32)                       # (V+1, D)
    x = jnp.take(embed, inst.astype(jnp.int32), axis=0, mode="clip")  # (B, T, D)
    x_tm = jnp.transpose(x, (1, 0, 2)).reshape(T * B, D)              # (T*B, D)

    # PyTorch LSTMCell: gates = x @ W_ih^T + h @ W_hh^T + b_ih + b_hh,
    # gate order (i, f, g, o) along the 4H axis — transposes keep that order.
    wih_t = jnp.transpose(params["w_ih"]).astype(jnp.float32)         # (D, 4H)
    whh_t = jnp.transpose(params["w_hh"]).astype(jnp.float32)         # (H, 4H)
    bias = (params["b_ih"] + params["b_hh"]).astype(jnp.float32)
    bias = bias.reshape(1, 4 * H)                                     # (1, 4H)

    return pl.pallas_call(
        _inst_encoder_kernel,
        out_shape=jax.ShapeDtypeStruct((B, H), jnp.float32),
        in_specs=[
            pl.BlockSpec(memory_space=pltpu.MemorySpace.VMEM),   # x (T*B, D)
            pl.BlockSpec(memory_space=pltpu.MemorySpace.VMEM),   # W_ih^T
            pl.BlockSpec(memory_space=pltpu.MemorySpace.VMEM),   # bias
            pl.BlockSpec(memory_space=pltpu.MemorySpace.VMEM),   # W_hh^T
        ],
        out_specs=pl.BlockSpec(memory_space=pltpu.MemorySpace.VMEM),
        scratch_shapes=[pltpu.VMEM((T * B, 4 * H), jnp.float32)],
    )(x_tm, wih_t, bias, whh_t)


def inst_encoder_reference(inst, params):
    """Pure-JAX reference (mirrors the PyTorch loop) for verification."""
    B, T = inst.shape
    H = RNN_SIZE
    x = jnp.take(params["embed"], inst, axis=0).astype(jnp.float32)  # (B, T, D)
    wih_t = jnp.transpose(params["w_ih"]).astype(jnp.float32)
    whh_t = jnp.transpose(params["w_hh"]).astype(jnp.float32)
    bias = (params["b_ih"] + params["b_hh"]).astype(jnp.float32)

    def step(carry, xt):
        h, c = carry
        gates = xt @ wih_t + h @ whh_t + bias
        i_g = jax.nn.sigmoid(gates[:, 0 * H:1 * H])
        f_g = jax.nn.sigmoid(gates[:, 1 * H:2 * H])
        g_g = jnp.tanh(gates[:, 2 * H:3 * H])
        o_g = jax.nn.sigmoid(gates[:, 3 * H:4 * H])
        c_new = f_g * c + i_g * g_g
        h_new = o_g * jnp.tanh(c_new)
        return (h_new, c_new), None

    h0 = jnp.zeros((B, H), jnp.float32)
    c0 = jnp.zeros((B, H), jnp.float32)
    (h, _), _ = lax.scan(step, (h0, c0), jnp.transpose(x, (1, 0, 2)))
    return h


def init_params(key, vocab_size):
    D, H = INPUT_SIZE, RNN_SIZE
    k0, k1, k2, k3, k4 = jax.random.split(key, 5)
    scale = 1.0 / jnp.sqrt(H)
    return {
        "embed": jax.random.normal(k0, (vocab_size + 1, D), jnp.float32) * 0.1,
        "w_ih": jax.random.uniform(k1, (4 * H, D), jnp.float32, -scale, scale),
        "w_hh": jax.random.uniform(k2, (4 * H, H), jnp.float32, -scale, scale),
        "b_ih": jax.random.uniform(k3, (4 * H,), jnp.float32, -scale, scale),
        "b_hh": jax.random.uniform(k4, (4 * H,), jnp.float32, -scale, scale),
    }


if __name__ == "__main__":
    key = jax.random.PRNGKey(0)
    vocab_size = 16
    B, T = 2, 8

    pkey, dkey = jax.random.split(key)
    params = init_params(pkey, vocab_size)
    inst = jax.random.randint(dkey, (B, T), 0, vocab_size + 1, dtype=jnp.int32)

    h_kernel = inst_encoder_forward(inst, params)
    jax.block_until_ready(h_kernel)

    h_ref = inst_encoder_reference(inst, params)
    assert h_kernel.shape == (B, RNN_SIZE)
    err = float(jnp.max(jnp.abs(h_kernel - h_ref)))
    assert jnp.allclose(h_kernel, h_ref, atol=1e-4, rtol=1e-4), err

    print("KERNEL_OK")
</pallas_src>

<mosaic_0001>
module attributes {stable_mosaic.version = 11 : i64} {
  func.func @_inst_encoder_kernel(%arg0: memref<16x64xf32, #tpu.memory_space<vmem>>, %arg1: memref<64x256xf32, #tpu.memory_space<vmem>>, %arg2: memref<1x256xf32, #tpu.memory_space<vmem>>, %arg3: memref<64x256xf32, #tpu.memory_space<vmem>>, %arg4: memref<2x64xf32, #tpu.memory_space<vmem>>, %arg5: memref<16x256xf32, #tpu.memory_space<vmem>>) attributes {dimension_semantics = [], scalar_prefetch = 0 : i64, scratch_operands = 1 : i64, tpu.core_type = #tpu.core_type<tc>} {
    %c0 = arith.constant 0 : index
    %c0_0 = arith.constant 0 : index
    %0 = vector.load %arg0[%c0, %c0_0] : memref<16x64xf32, #tpu.memory_space<vmem>>, vector<16x64xf32>
    %c0_1 = arith.constant 0 : index
    %c0_2 = arith.constant 0 : index
    %1 = vector.load %arg1[%c0_1, %c0_2] : memref<64x256xf32, #tpu.memory_space<vmem>>, vector<64x256xf32>
    %cst = arith.constant dense<0.000000e+00> : vector<16x256xf32>
    %2 = tpu.matmul %0, %1, %cst {dimension_numbers = #tpu.dot_dimension_numbers<[1], [0], [0], [1], [0, 0, 1, 1], [], []>} : vector<16x64xf32>, vector<64x256xf32>, vector<16x256xf32> -> vector<16x256xf32>
    %c0_3 = arith.constant 0 : index
    %c0_4 = arith.constant 0 : index
    %3 = vector.load %arg2[%c0_3, %c0_4] : memref<1x256xf32, #tpu.memory_space<vmem>>, vector<1x256xf32>
    %4 = vector.broadcast %3 : vector<1x256xf32> to vector<16x256xf32>
    %5 = arith.addf %2, %4 : vector<16x256xf32>
    %c0_5 = arith.constant 0 : index
    %c0_6 = arith.constant 0 : index
    %6 = vector.load %arg5[%c0_5, %c0_6] : memref<16x256xf32, #tpu.memory_space<vmem>>, vector<16x256xf32>
    tpu.vector_store %arg5[%c0_5, %c0_6], %5 {strides = array<i32>} : memref<16x256xf32, #tpu.memory_space<vmem>>, vector<16x256xf32>,
    %cst_7 = arith.constant 0.000000e+00 : f32
    %7 = vector.broadcast %cst_7 : f32 to vector<2x64xf32>
    %cst_8 = arith.constant 0.000000e+00 : f32
    %8 = vector.broadcast %cst_8 : f32 to vector<2x64xf32>
    %c0_i32 = arith.constant 0 : i32
    %c2_i32 = arith.constant 2 : i32
    %9 = arith.muli %c0_i32, %c2_i32 : i32
    %10 = arith.index_cast %9 : i32 to index
    %c0_9 = arith.constant 0 : index
    %11 = vector.load %arg5[%10, %c0_9] : memref<16x256xf32, #tpu.memory_space<vmem>>, vector<2x256xf32>
    %c0_10 = arith.constant 0 : index
    %c0_11 = arith.constant 0 : index
    %12 = vector.load %arg3[%c0_10, %c0_11] : memref<64x256xf32, #tpu.memory_space<vmem>>, vector<64x256xf32>
    %cst_12 = arith.constant dense<0.000000e+00> : vector<2x256xf32>
    %13 = tpu.matmul %7, %12, %cst_12 {dimension_numbers = #tpu.dot_dimension_numbers<[1], [0], [0], [1], [0, 0, 1, 1], [], []>} : vector<2x64xf32>, vector<64x256xf32>, vector<2x256xf32> -> vector<2x256xf32>
    %14 = arith.addf %11, %13 : vector<2x256xf32>
    %15 = vector.extract_strided_slice %14 {offsets = [0, 0], sizes = [2, 64], strides = [1, 1]} : vector<2x256xf32> to vector<2x64xf32>
    %16 = arith.negf %15 : vector<2x64xf32>
    %17 = math.exp %16 : vector<2x64xf32>
    %cst_13 = arith.constant 1.000000e+00 : f32
    %18 = vector.broadcast %cst_13 : f32 to vector<2x64xf32>
    %19 = arith.addf %18, %17 : vector<2x64xf32>
    %20 = arith.divf %18, %19 : vector<2x64xf32>
    %21 = vector.extract_strided_slice %14 {offsets = [0, 64], sizes = [2, 64], strides = [1, 1]} : vector<2x256xf32> to vector<2x64xf32>
    %22 = arith.negf %21 : vector<2x64xf32>
    %23 = math.exp %22 : vector<2x64xf32>
    %cst_14 = arith.constant 1.000000e+00 : f32
    %24 = vector.broadcast %cst_14 : f32 to vector<2x64xf32>
    %25 = arith.addf %24, %23 : vector<2x64xf32>
    %26 = arith.divf %24, %25 : vector<2x64xf32>
    %27 = vector.extract_strided_slice %14 {offsets = [0, 128], sizes = [2, 64], strides = [1, 1]} : vector<2x256xf32> to vector<2x64xf32>
    %28 = math.tanh %27 : vector<2x64xf32>
    %29 = vector.extract_strided_slice %14 {offsets = [0, 192], sizes = [2, 64], strides = [1, 1]} : vector<2x256xf32> to vector<2x64xf32>
    %30 = arith.negf %29 : vector<2x64xf32>
    %31 = math.exp %30 : vector<2x64xf32>
    %cst_15 = arith.constant 1.000000e+00 : f32
    %32 = vector.broadcast %cst_15 : f32 to vector<2x64xf32>
    %33 = arith.addf %32, %31 : vector<2x64xf32>
    %34 = arith.divf %32, %33 : vector<2x64xf32>
    %35 = arith.mulf %26, %8 : vector<2x64xf32>
    %36 = arith.mulf %20, %28 : vector<2x64xf32>
    %37 = arith.addf %35, %36 : vector<2x64xf32>
    %38 = math.tanh %37 : vector<2x64xf32>
    %39 = arith.mulf %34, %38 : vector<2x64xf32>
    %c1_i32 = arith.constant 1 : i32
    %c2_i32_16 = arith.constant 2 : i32
    %40 = arith.muli %c1_i32, %c2_i32_16 : i32
    %41 = arith.index_cast %40 : i32 to index
    %c0_17 = arith.constant 0 : index
    %42 = vector.load %arg5[%41, %c0_17] : memref<16x256xf32, #tpu.memory_space<vmem>>, vector<2x256xf32>
    %c0_18 = arith.constant 0 : index
    %c0_19 = arith.constant 0 : index
    %43 = vector.load %arg3[%c0_18, %c0_19] : memref<64x256xf32, #tpu.memory_space<vmem>>, vector<64x256xf32>
    %cst_20 = arith.constant dense<0.000000e+00> : vector<2x256xf32>
    %44 = tpu.matmul %39, %43, %cst_20 {dimension_numbers = #tpu.dot_dimension_numbers<[1], [0], [0], [1], [0, 0, 1, 1], [], []>} : vector<2x64xf32>, vector<64x256xf32>, vector<2x256xf32> -> vector<2x256xf32>
    %45 = arith.addf %42, %44 : vector<2x256xf32>
    %46 = vector.extract_strided_slice %45 {offsets = [0, 0], sizes = [2, 64], strides = [1, 1]} : vector<2x256xf32> to vector<2x64xf32>
    %47 = arith.negf %46 : vector<2x64xf32>
    %48 = math.exp %47 : vector<2x64xf32>
    %cst_21 = arith.constant 1.000000e+00 : f32
    %49 = vector.broadcast %cst_21 : f32 to vector<2x64xf32>
    %50 = arith.addf %49, %48 : vector<2x64xf32>
    %51 = arith.divf %49, %50 : vector<2x64xf32>
    %52 = vector.extract_strided_slice %45 {offsets = [0, 64], sizes = [2, 64], strides = [1, 1]} : vector<2x256xf32> to vector<2x64xf32>
    %53 = arith.negf %52 : vector<2x64xf32>
    %54 = math.exp %53 : vector<2x64xf32>
    %cst_22 = arith.constant 1.000000e+00 : f32
    %55 = vector.broadcast %cst_22 : f32 to vector<2x64xf32>
    %56 = arith.addf %55, %54 : vector<2x64xf32>
    %57 = arith.divf %55, %56 : vector<2x64xf32>
    %58 = vector.extract_strided_slice %45 {offsets = [0, 128], sizes = [2, 64], strides = [1, 1]} : vector<2x256xf32> to vector<2x64xf32>
    %59 = math.tanh %58 : vector<2x64xf32>
    %60 = vector.extract_strided_slice %45 {offsets = [0, 192], sizes = [2, 64], strides = [1, 1]} : vector<2x256xf32> to vector<2x64xf32>
    %61 = arith.negf %60 : vector<2x64xf32>
    %62 = math.exp %61 : vector<2x64xf32>
    %cst_23 = arith.constant 1.000000e+00 : f32
    %63 = vector.broadcast %cst_23 : f32 to vector<2x64xf32>
    %64 = arith.addf %63, %62 : vector<2x64xf32>
    %65 = arith.divf %63, %64 : vector<2x64xf32>
    %66 = arith.mulf %57, %37 : vector<2x64xf32>
    %67 = arith.mulf %51, %59 : vector<2x64xf32>
    %68 = arith.addf %66, %67 : vector<2x64xf32>
    %69 = math.tanh %68 : vector<2x64xf32>
    %70 = arith.mulf %65, %69 : vector<2x64xf32>
    %c2_i32_24 = arith.constant 2 : i32
    %c2_i32_25 = arith.constant 2 : i32
    %71 = arith.muli %c2_i32_24, %c2_i32_25 : i32
    %72 = arith.index_cast %71 : i32 to index
    %c0_26 = arith.constant 0 : index
    %73 = vector.load %arg5[%72, %c0_26] : memref<16x256xf32, #tpu.memory_space<vmem>>, vector<2x256xf32>
    %c0_27 = arith.constant 0 : index
    %c0_28 = arith.constant 0 : index
    %74 = vector.load %arg3[%c0_27, %c0_28] : memref<64x256xf32, #tpu.memory_space<vmem>>, vector<64x256xf32>
    %cst_29 = arith.constant dense<0.000000e+00> : vector<2x256xf32>
    %75 = tpu.matmul %70, %74, %cst_29 {dimension_numbers = #tpu.dot_dimension_numbers<[1], [0], [0], [1], [0, 0, 1, 1], [], []>} : vector<2x64xf32>, vector<64x256xf32>, vector<2x256xf32> -> vector<2x256xf32>
    %76 = arith.addf %73, %75 : vector<2x256xf32>
    %77 = vector.extract_strided_slice %76 {offsets = [0, 0], sizes = [2, 64], strides = [1, 1]} : vector<2x256xf32> to vector<2x64xf32>
    %78 = arith.negf %77 : vector<2x64xf32>
    %79 = math.exp %78 : vector<2x64xf32>
    %cst_30 = arith.constant 1.000000e+00 : f32
    %80 = vector.broadcast %cst_30 : f32 to vector<2x64xf32>
    %81 = arith.addf %80, %79 : vector<2x64xf32>
    %82 = arith.divf %80, %81 : vector<2x64xf32>
    %83 = vector.extract_strided_slice %76 {offsets = [0, 64], sizes = [2, 64], strides = [1, 1]} : vector<2x256xf32> to vector<2x64xf32>
    %84 = arith.negf %83 : vector<2x64xf32>
    %85 = math.exp %84 : vector<2x64xf32>
    %cst_31 = arith.constant 1.000000e+00 : f32
    %86 = vector.broadcast %cst_31 : f32 to vector<2x64xf32>
    %87 = arith.addf %86, %85 : vector<2x64xf32>
    %88 = arith.divf %86, %87 : vector<2x64xf32>
    %89 = vector.extract_strided_slice %76 {offsets = [0, 128], sizes = [2, 64], strides = [1, 1]} : vector<2x256xf32> to vector<2x64xf32>
    %90 = math.tanh %89 : vector<2x64xf32>
    %91 = vector.extract_strided_slice %76 {offsets = [0, 192], sizes = [2, 64], strides = [1, 1]} : vector<2x256xf32> to vector<2x64xf32>
    %92 = arith.negf %91 : vector<2x64xf32>
    %93 = math.exp %92 : vector<2x64xf32>
    %cst_32 = arith.constant 1.000000e+00 : f32
    %94 = vector.broadcast %cst_32 : f32 to vector<2x64xf32>
    %95 = arith.addf %94, %93 : vector<2x64xf32>
    %96 = arith.divf %94, %95 : vector<2x64xf32>
    %97 = arith.mulf %88, %68 : vector<2x64xf32>
    %98 = arith.mulf %82, %90 : vector<2x64xf32>
    %99 = arith.addf %97, %98 : vector<2x64xf32>
    %100 = math.tanh %99 : vector<2x64xf32>
    %101 = arith.mulf %96, %100 : vector<2x64xf32>
    %c3_i32 = arith.constant 3 : i32
    %c2_i32_33 = arith.constant 2 : i32
    %102 = arith.muli %c3_i32, %c2_i32_33 : i32
    %103 = arith.index_cast %102 : i32 to index
    %c0_34 = arith.constant 0 : index
    %104 = vector.load %arg5[%103, %c0_34] : memref<16x256xf32, #tpu.memory_space<vmem>>, vector<2x256xf32>
    %c0_35 = arith.constant 0 : index
    %c0_36 = arith.constant 0 : index
    %105 = vector.load %arg3[%c0_35, %c0_36] : memref<64x256xf32, #tpu.memory_space<vmem>>, vector<64x256xf32>
    %cst_37 = arith.constant dense<0.000000e+00> : vector<2x256xf32>
    %106 = tpu.matmul %101, %105, %cst_37 {dimension_numbers = #tpu.dot_dimension_numbers<[1], [0], [0], [1], [0, 0, 1, 1], [], []>} : vector<2x64xf32>, vector<64x256xf32>, vector<2x256xf32> -> vector<2x256xf32>
    %107 = arith.addf %104, %106 : vector<2x256xf32>
    %108 = vector.extract_strided_slice %107 {offsets = [0, 0], sizes = [2, 64], strides = [1, 1]} : vector<2x256xf32> to vector<2x64xf32>
    %109 = arith.negf %108 : vector<2x64xf32>
    %110 = math.exp %109 : vector<2x64xf32>
    %cst_38 = arith.constant 1.000000e+00 : f32
    %111 = vector.broadcast %cst_38 : f32 to vector<2x64xf32>
    %112 = arith.addf %111, %110 : vector<2x64xf32>
    %113 = arith.divf %111, %112 : vector<2x64xf32>
    %114 = vector.extract_strided_slice %107 {offsets = [0, 64], sizes = [2, 64], strides = [1, 1]} : vector<2x256xf32> to vector<2x64xf32>
    %115 = arith.negf %114 : vector<2x64xf32>
    %116 = math.exp %115 : vector<2x64xf32>
    %cst_39 = arith.constant 1.000000e+00 : f32
    %117 = vector.broadcast %cst_39 : f32 to vector<2x64xf32>
    %118 = arith.addf %117, %116 : vector<2x64xf32>
    %119 = arith.divf %117, %118 : vector<2x64xf32>
    %120 = vector.extract_strided_slice %107 {offsets = [0, 128], sizes = [2, 64], strides = [1, 1]} : vector<2x256xf32> to vector<2x64xf32>
    %121 = math.tanh %120 : vector<2x64xf32>
    %122 = vector.extract_strided_slice %107 {offsets = [0, 192], sizes = [2, 64], strides = [1, 1]} : vector<2x256xf32> to vector<2x64xf32>
    %123 = arith.negf %122 : vector<2x64xf32>
    %124 = math.exp %123 : vector<2x64xf32>
    %cst_40 = arith.constant 1.000000e+00 : f32
    %125 = vector.broadcast %cst_40 : f32 to vector<2x64xf32>
    %126 = arith.addf %125, %124 : vector<2x64xf32>
    %127 = arith.divf %125, %126 : vector<2x64xf32>
    %128 = arith.mulf %119, %99 : vector<2x64xf32>
    %129 = arith.mulf %113, %121 : vector<2x64xf32>
    %130 = arith.addf %128, %129 : vector<2x64xf32>
    %131 = math.tanh %130 : vector<2x64xf32>
    %132 = arith.mulf %127, %131 : vector<2x64xf32>
    %c4_i32 = arith.constant 4 : i32
    %c2_i32_41 = arith.constant 2 : i32
    %133 = arith.muli %c4_i32, %c2_i32_41 : i32
    %134 = arith.index_cast %133 : i32 to index
    %c0_42 = arith.constant 0 : index
    %135 = vector.load %arg5[%134, %c0_42] : memref<16x256xf32, #tpu.memory_space<vmem>>, vector<2x256xf32>
    %c0_43 = arith.constant 0 : index
    %c0_44 = arith.constant 0 : index
    %136 = vector.load %arg3[%c0_43, %c0_44] : memref<64x256xf32, #tpu.memory_space<vmem>>, vector<64x256xf32>
    %cst_45 = arith.constant dense<0.000000e+00> : vector<2x256xf32>
    %137 = tpu.matmul %132, %136, %cst_45 {dimension_numbers = #tpu.dot_dimension_numbers<[1], [0], [0], [1], [0, 0, 1, 1], [], []>} : vector<2x64xf32>, vector<64x256xf32>, vector<2x256xf32> -> vector<2x256xf32>
    %138 = arith.addf %135, %137 : vector<2x256xf32>
    %139 = vector.extract_strided_slice %138 {offsets = [0, 0], sizes = [2, 64], strides = [1, 1]} : vector<2x256xf32> to vector<2x64xf32>
    %140 = arith.negf %139 : vector<2x64xf32>
    %141 = math.exp %140 : vector<2x64xf32>
    %cst_46 = arith.constant 1.000000e+00 : f32
    %142 = vector.broadcast %cst_46 : f32 to vector<2x64xf32>
    %143 = arith.addf %142, %141 : vector<2x64xf32>
    %144 = arith.divf %142, %143 : vector<2x64xf32>
    %145 = vector.extract_strided_slice %138 {offsets = [0, 64], sizes = [2, 64], strides = [1, 1]} : vector<2x256xf32> to vector<2x64xf32>
    %146 = arith.negf %145 : vector<2x64xf32>
    %147 = math.exp %146 : vector<2x64xf32>
    %cst_47 = arith.constant 1.000000e+00 : f32
    %148 = vector.broadcast %cst_47 : f32 to vector<2x64xf32>
    %149 = arith.addf %148, %147 : vector<2x64xf32>
    %150 = arith.divf %148, %149 : vector<2x64xf32>
    %151 = vector.extract_strided_slice %138 {offsets = [0, 128], sizes = [2, 64], strides = [1, 1]} : vector<2x256xf32> to vector<2x64xf32>
    %152 = math.tanh %151 : vector<2x64xf32>
    %153 = vector.extract_strided_slice %138 {offsets = [0, 192], sizes = [2, 64], strides = [1, 1]} : vector<2x256xf32> to vector<2x64xf32>
    %154 = arith.negf %153 : vector<2x64xf32>
    %155 = math.exp %154 : vector<2x64xf32>
    %cst_48 = arith.constant 1.000000e+00 : f32
    %156 = vector.broadcast %cst_48 : f32 to vector<2x64xf32>
    %157 = arith.addf %156, %155 : vector<2x64xf32>
    %158 = arith.divf %156, %157 : vector<2x64xf32>
    %159 = arith.mulf %150, %130 : vector<2x64xf32>
    %160 = arith.mulf %144, %152 : vector<2x64xf32>
    %161 = arith.addf %159, %160 : vector<2x64xf32>
    %162 = math.tanh %161 : vector<2x64xf32>
    %163 = arith.mulf %158, %162 : vector<2x64xf32>
    %c5_i32 = arith.constant 5 : i32
    %c2_i32_49 = arith.constant 2 : i32
    %164 = arith.muli %c5_i32, %c2_i32_49 : i32
    %165 = arith.index_cast %164 : i32 to index
    %c0_50 = arith.constant 0 : index
    %166 = vector.load %arg5[%165, %c0_50] : memref<16x256xf32, #tpu.memory_space<vmem>>, vector<2x256xf32>
    %c0_51 = arith.constant 0 : index
    %c0_52 = arith.constant 0 : index
    %167 = vector.load %arg3[%c0_51, %c0_52] : memref<64x256xf32, #tpu.memory_space<vmem>>, vector<64x256xf32>
    %cst_53 = arith.constant dense<0.000000e+00> : vector<2x256xf32>
    %168 = tpu.matmul %163, %167, %cst_53 {dimension_numbers = #tpu.dot_dimension_numbers<[1], [0], [0], [1], [0, 0, 1, 1], [], []>} : vector<2x64xf32>, vector<64x256xf32>, vector<2x256xf32> -> vector<2x256xf32>
    %169 = arith.addf %166, %168 : vector<2x256xf32>
    %170 = vector.extract_strided_slice %169 {offsets = [0, 0], sizes = [2, 64], strides = [1, 1]} : vector<2x256xf32> to vector<2x64xf32>
    %171 = arith.negf %170 : vector<2x64xf32>
    %172 = math.exp %171 : vector<2x64xf32>
    %cst_54 = arith.constant 1.000000e+00 : f32
    %173 = vector.broadcast %cst_54 : f32 to vector<2x64xf32>
    %174 = arith.addf %173, %172 : vector<2x64xf32>
    %175 = arith.divf %173, %174 : vector<2x64xf32>
    %176 = vector.extract_strided_slice %169 {offsets = [0, 64], sizes = [2, 64], strides = [1, 1]} : vector<2x256xf32> to vector<2x64xf32>
    %177 = arith.negf %176 : vector<2x64xf32>
    %178 = math.exp %177 : vector<2x64xf32>
    %cst_55 = arith.constant 1.000000e+00 : f32
    %179 = vector.broadcast %cst_55 : f32 to vector<2x64xf32>
    %180 = arith.addf %179, %178 : vector<2x64xf32>
    %181 = arith.divf %179, %180 : vector<2x64xf32>
    %182 = vector.extract_strided_slice %169 {offsets = [0, 128], sizes = [2, 64], strides = [1, 1]} : vector<2x256xf32> to vector<2x64xf32>
    %183 = math.tanh %182 : vector<2x64xf32>
    %184 = vector.extract_strided_slice %169 {offsets = [0, 192], sizes = [2, 64], strides = [1, 1]} : vector<2x256xf32> to vector<2x64xf32>
    %185 = arith.negf %184 : vector<2x64xf32>
    %186 = math.exp %185 : vector<2x64xf32>
    %cst_56 = arith.constant 1.000000e+00 : f32
    %187 = vector.broadcast %cst_56 : f32 to vector<2x64xf32>
    %188 = arith.addf %187, %186 : vector<2x64xf32>
    %189 = arith.divf %187, %188 : vector<2x64xf32>
    %190 = arith.mulf %181, %161 : vector<2x64xf32>
    %191 = arith.mulf %175, %183 : vector<2x64xf32>
    %192 = arith.addf %190, %191 : vector<2x64xf32>
    %193 = math.tanh %192 : vector<2x64xf32>
    %194 = arith.mulf %189, %193 : vector<2x64xf32>
    %c6_i32 = arith.constant 6 : i32
    %c2_i32_57 = arith.constant 2 : i32
    %195 = arith.muli %c6_i32, %c2_i32_57 : i32
    %196 = arith.index_cast %195 : i32 to index
    %c0_58 = arith.constant 0 : index
    %197 = vector.load %arg5[%196, %c0_58] : memref<16x256xf32, #tpu.memory_space<vmem>>, vector<2x256xf32>
    %c0_59 = arith.constant 0 : index
    %c0_60 = arith.constant 0 : index
    %198 = vector.load %arg3[%c0_59, %c0_60] : memref<64x256xf32, #tpu.memory_space<vmem>>, vector<64x256xf32>
    %cst_61 = arith.constant dense<0.000000e+00> : vector<2x256xf32>
    %199 = tpu.matmul %194, %198, %cst_61 {dimension_numbers = #tpu.dot_dimension_numbers<[1], [0], [0], [1], [0, 0, 1, 1], [], []>} : vector<2x64xf32>, vector<64x256xf32>, vector<2x256xf32> -> vector<2x256xf32>
    %200 = arith.addf %197, %199 : vector<2x256xf32>
    %201 = vector.extract_strided_slice %200 {offsets = [0, 0], sizes = [2, 64], strides = [1, 1]} : vector<2x256xf32> to vector<2x64xf32>
    %202 = arith.negf %201 : vector<2x64xf32>
    %203 = math.exp %202 : vector<2x64xf32>
    %cst_62 = arith.constant 1.000000e+00 : f32
    %204 = vector.broadcast %cst_62 : f32 to vector<2x64xf32>
    %205 = arith.addf %204, %203 : vector<2x64xf32>
    %206 = arith.divf %204, %205 : vector<2x64xf32>
    %207 = vector.extract_strided_slice %200 {offsets = [0, 64], sizes = [2, 64], strides = [1, 1]} : vector<2x256xf32> to vector<2x64xf32>
    %208 = arith.negf %207 : vector<2x64xf32>
    %209 = math.exp %208 : vector<2x64xf32>
    %cst_63 = arith.constant 1.000000e+00 : f32
    %210 = vector.broadcast %cst_63 : f32 to vector<2x64xf32>
    %211 = arith.addf %210, %209 : vector<2x64xf32>
    %212 = arith.divf %210, %211 : vector<2x64xf32>
    %213 = vector.extract_strided_slice %200 {offsets = [0, 128], sizes = [2, 64], strides = [1, 1]} : vector<2x256xf32> to vector<2x64xf32>
    %214 = math.tanh %213 : vector<2x64xf32>
    %215 = vector.extract_strided_slice %200 {offsets = [0, 192], sizes = [2, 64], strides = [1, 1]} : vector<2x256xf32> to vector<2x64xf32>
    %216 = arith.negf %215 : vector<2x64xf32>
    %217 = math.exp %216 : vector<2x64xf32>
    %cst_64 = arith.constant 1.000000e+00 : f32
    %218 = vector.broadcast %cst_64 : f32 to vector<2x64xf32>
    %219 = arith.addf %218, %217 : vector<2x64xf32>
    %220 = arith.divf %218, %219 : vector<2x64xf32>
    %221 = arith.mulf %212, %192 : vector<2x64xf32>
    %222 = arith.mulf %206, %214 : vector<2x64xf32>
    %223 = arith.addf %221, %222 : vector<2x64xf32>
    %224 = math.tanh %223 : vector<2x64xf32>
    %225 = arith.mulf %220, %224 : vector<2x64xf32>
    %c7_i32 = arith.constant 7 : i32
    %c2_i32_65 = arith.constant 2 : i32
    %226 = arith.muli %c7_i32, %c2_i32_65 : i32
    %227 = arith.index_cast %226 : i32 to index
    %c0_66 = arith.constant 0 : index
    %228 = vector.load %arg5[%227, %c0_66] : memref<16x256xf32, #tpu.memory_space<vmem>>, vector<2x256xf32>
    %c0_67 = arith.constant 0 : index
    %c0_68 = arith.constant 0 : index
    %229 = vector.load %arg3[%c0_67, %c0_68] : memref<64x256xf32, #tpu.memory_space<vmem>>, vector<64x256xf32>
    %cst_69 = arith.constant dense<0.000000e+00> : vector<2x256xf32>
    %230 = tpu.matmul %225, %229, %cst_69 {dimension_numbers = #tpu.dot_dimension_numbers<[1], [0], [0], [1], [0, 0, 1, 1], [], []>} : vector<2x64xf32>, vector<64x256xf32>, vector<2x256xf32> -> vector<2x256xf32>
    %231 = arith.addf %228, %230 : vector<2x256xf32>
    %232 = vector.extract_strided_slice %231 {offsets = [0, 0], sizes = [2, 64], strides = [1, 1]} : vector<2x256xf32> to vector<2x64xf32>
    %233 = arith.negf %232 : vector<2x64xf32>
    %234 = math.exp %233 : vector<2x64xf32>
    %cst_70 = arith.constant 1.000000e+00 : f32
    %235 = vector.broadcast %cst_70 : f32 to vector<2x64xf32>
    %236 = arith.addf %235, %234 : vector<2x64xf32>
    %237 = arith.divf %235, %236 : vector<2x64xf32>
    %238 = vector.extract_strided_slice %231 {offsets = [0, 64], sizes = [2, 64], strides = [1, 1]} : vector<2x256xf32> to vector<2x64xf32>
    %239 = arith.negf %238 : vector<2x64xf32>
    %240 = math.exp %239 : vector<2x64xf32>
    %cst_71 = arith.constant 1.000000e+00 : f32
    %241 = vector.broadcast %cst_71 : f32 to vector<2x64xf32>
    %242 = arith.addf %241, %240 : vector<2x64xf32>
    %243 = arith.divf %241, %242 : vector<2x64xf32>
    %244 = vector.extract_strided_slice %231 {offsets = [0, 128], sizes = [2, 64], strides = [1, 1]} : vector<2x256xf32> to vector<2x64xf32>
    %245 = math.tanh %244 : vector<2x64xf32>
    %246 = vector.extract_strided_slice %231 {offsets = [0, 192], sizes = [2, 64], strides = [1, 1]} : vector<2x256xf32> to vector<2x64xf32>
    %247 = arith.negf %246 : vector<2x64xf32>
    %248 = math.exp %247 : vector<2x64xf32>
    %cst_72 = arith.constant 1.000000e+00 : f32
    %249 = vector.broadcast %cst_72 : f32 to vector<2x64xf32>
    %250 = arith.addf %249, %248 : vector<2x64xf32>
    %251 = arith.divf %249, %250 : vector<2x64xf32>
    %252 = arith.mulf %243, %223 : vector<2x64xf32>
    %253 = arith.mulf %237, %245 : vector<2x64xf32>
    %254 = arith.addf %252, %253 : vector<2x64xf32>
    %255 = math.tanh %254 : vector<2x64xf32>
    %256 = arith.mulf %251, %255 : vector<2x64xf32>
    %c8_i32 = arith.constant 8 : i32
    %c0_73 = arith.constant 0 : index
    %c0_74 = arith.constant 0 : index
    %257 = vector.load %arg4[%c0_73, %c0_74] : memref<2x64xf32, #tpu.memory_space<vmem>>, vector<2x64xf32>
    tpu.vector_store %arg4[%c0_73, %c0_74], %256 {strides = array<i32>} : memref<2x64xf32, #tpu.memory_space<vmem>>, vector<2x64xf32>,
    return
  }
}

</mosaic_0001>

<llo_original>
// kernel: inst_encoder_forward.1
$region0: #{inst_encoder_forward.1}
  #allocation0 [shape = 'u32[]', space=smem, size = 0x4, offset = 0x4, fixed_abs, tag = 'smem constant byte address 0x4 - core index']
  #allocation1 [shape = 'u32[144,128]{1,0:T(1,128)}', space=vmem, size = 0x12000, scoped, tag = 'internal scratch']
  #allocation2 [shape = 'f32[16,256]{1,0:T(8,128)}', space=vmem, size = 0x4000, scoped, tag = 'scratch operand']
  %s0 = inlined_call_operand.vmem [shape: f32[16,64], index: 0, kind: input, shape index: {}]
  %s1 = inlined_call_operand.vmem [shape: f32[64,256], index: 1, kind: input, shape index: {}]
  %s2 = inlined_call_operand.vmem [shape: f32[1,256], index: 2, kind: input, shape index: {}]
  %s3 = inlined_call_operand.hbm [shape: f32[64,256], index: 3, kind: input, shape index: {}]
  %s4 = inlined_call_operand.hbm [shape: f32[2,64], index: 4, kind: output, shape index: {}]
  %s5 = sld [smem:[#allocation0]]
  $region30: #{inst_encoder_forward.1} parent=0
    _
  %s7 = ssub.s32 1, %s5
  %s8 = scalar_select 0, %s7, %s5
  $region1: #{inst_encoder_forward.1} parent=0
    #allocation3 [shape = 'u8[65536]{0}', space=vmem, size = 0x10000, scoped, tag = 'input window, operand 3, single buffered']
    #allocation4 [shape = 's32[1]{0}', space=sflag, size = 0x4, scoped, tag = 'scoped memory for inst_encoder_forward.1']
    #allocation5 [shape = 's32[1]{0}', space=sflag, size = 0x4, scoped, tag = 'scoped memory for inst_encoder_forward.1']
    #allocation6 [shape = 'u8[1024]{0}', space=vmem, size = 0x400, scoped, tag = 'output window, operand 0, single buffered']
    %9 = vsyncpa [#allocation4], 0
    %10 = vsyncpa [#allocation5], 0
    // Predicated region
    $region2: #{inst_encoder_forward.1} parent=1 // pred_check
      _
    $region3: #{inst_encoder_forward.1} parent=1 // pred_check_branch
      %12 = sbr.rel (0) target = $region5
    $region4: #{inst_encoder_forward.1} parent=1 // pred_region
      _
    $region5: #{inst_encoder_forward.1} parent=1 // pred_fallthru
      _
    // Predicated region
    $region6: #{inst_encoder_forward.1} parent=1 // pred_check
      _
    $region7: #{inst_encoder_forward.1} parent=1 // pred_check_branch
      %14 = sbr.rel (0) target = $region9
    $region8: #{inst_encoder_forward.1} parent=1 // pred_region
      _
    $region9: #{inst_encoder_forward.1} parent=1 // pred_fallthru
      _
    // Predicated region
    $region10: #{inst_encoder_forward.1} parent=1 // pred_check
      _
    $region11: #{inst_encoder_forward.1} parent=1 // pred_check_branch
      %16 = sbr.rel (0) target = $region13
    $region12: #{inst_encoder_forward.1} parent=1 // pred_region
      _
    $region13: #{inst_encoder_forward.1} parent=1 // pred_fallthru
      _
    // Predicated region
    $region14: #{inst_encoder_forward.1} parent=1 // pred_check
      _
    $region15: #{inst_encoder_forward.1} parent=1 // pred_check_branch
      %18 = sbr.rel (0) target = $region17
    $region16: #{inst_encoder_forward.1} parent=1 // pred_region
      %s20 = ssub.s32 2048, 2048
      %21 = vsyncadd [#allocation4], %s20
      %s22 = sshll.u32 [#allocation3], 4
      %s23 = int_to_ptr.vmem [resolvable:$true] %s22
      %28 = dma.hbm_to_vmem [thread:$0]  %s3, 2048, %s23, [#allocation4], 256, 256, 16
    $region17: #{inst_encoder_forward.1} parent=1 // pred_fallthru
      _
    // Predicated region
    $region18: #{inst_encoder_forward.1} parent=1 // pred_check
      _
    $region19: #{inst_encoder_forward.1} parent=1 // pred_check_branch
      %30 = sbr.rel (0) target = $region21
    $region20: #{inst_encoder_forward.1} parent=1 // pred_region
      %31 = dma.done [#allocation4], 2048
    $region21: #{inst_encoder_forward.1} parent=1 // pred_fallthru
      _
    %v32 = vld [vmem:[%s0] sm:$0xff]
    %v33 = vld [vmem:[%s0 + $0x8] sm:$0xff]
    %v34 = vld [vmem:[%s1] sm:$0xff]
    %v35 = vld [vmem:[%s1 + $0x8] sm:$0xff]
    %v36 = vld [vmem:[%s1 + $0x10] sm:$0xff]
    %v37 = vld [vmem:[%s1 + $0x18] sm:$0xff]
    %v38 = vld [vmem:[%s1 + $0x20] sm:$0xff]
    %v39 = vld [vmem:[%s1 + $0x28] sm:$0xff]
    %v40 = vld [vmem:[%s1 + $0x30] sm:$0xff]
    %v41 = vld [vmem:[%s1 + $0x38] sm:$0xff]
    %v42 = vld [vmem:[%s1 + $0x40] sm:$0xff]
    %v43 = vld [vmem:[%s1 + $0x48] sm:$0xff]
    %v44 = vld [vmem:[%s1 + $0x50] sm:$0xff]
    %v45 = vld [vmem:[%s1 + $0x58] sm:$0xff]
    %v46 = vld [vmem:[%s1 + $0x60] sm:$0xff]
    %v47 = vld [vmem:[%s1 + $0x68] sm:$0xff]
    %v48 = vld [vmem:[%s1 + $0x70] sm:$0xff]
    %v49 = vld [vmem:[%s1 + $0x78] sm:$0xff]
    %v50 = vld [vmem:[%s2] sm:$0x3]
    %v52 = vlaneseq
    %v53 = vshrl.u32 %v52, 7
    %v54 = vsub.s32 0, %v53
    %v55 = vrot.slane %v50, %v54
    %v56 = vlaneseq
    %v57 = vshrl.u32 %v56, 7
    %v58 = vsub.s32 1, %v57
    %v59 = vrot.slane %v50, %v58
    %vm62 = vcmask 523264
    %v64 = vsel %vm62, %v32, 0
    %v67 = vsel %vm62, %v33, 0
    %69 = vmatprep.subr.mxu0 0.0
    %70 = vmatpush1.msra.mxu0 0.0
    %71 = vmatprep.subr.mxu0 0.0
    %72 = vmatpush1.msra.mxu0 0.0
    %73 = vmatprep.subr.mxu0 0.0
    %74 = vmatpush1.msra.mxu0 0.0
    %75 = vmatprep.subr.mxu0 0.0
    %76 = vmatpush1.msra.mxu0 0.0
    %77 = vmatprep.subr.mxu0 0.0
    %78 = vmatpush1.msra.mxu0 0.0
    %79 = vmatprep.subr.mxu0 0.0
    %80 = vmatpush1.msra.mxu0 0.0
    %81 = vmatprep.subr.mxu0 0.0
    %82 = vmatpush1.msra.mxu0 0.0
    %83 = vmatprep.subr.mxu0 0.0
    %84 = vmatpush1.msra.mxu0 0.0
    %85 = vmatprep.subr.mxu0 %v49
    %86 = vmatpush1.msra.mxu0 %v48
    %87 = vmatprep.subr.mxu0 %v47
    %88 = vmatpush1.msra.mxu0 %v46
    %89 = vmatprep.subr.mxu0 %v45
    %90 = vmatpush1.msra.mxu0 %v44
    %91 = vmatprep.subr.mxu0 %v43
    %92 = vmatpush1.msra.mxu0 %v42
    %93 = vmatprep.subr.mxu0 %v41
    %94 = vmatpush1.msra.mxu0 %v40
    %95 = vmatprep.subr.mxu0 %v39
    %96 = vmatpush1.msra.mxu0 %v38
    %97 = vmatprep.subr.mxu0 %v37
    %98 = vmatpush1.msra.mxu0 %v36
    %99 = vmatprep.subr.mxu0 %v35
    %100 = vmatpush1.msra.mxu0 %v34
    %101 = vmatprep.subr.mxu0 0.0
    %102 = vmatpush2.msra.mxu0 0.0
    %103 = vmatprep.subr.mxu0 0.0
    %104 = vmatpush2.msra.mxu0 0.0
    %105 = vmatprep.subr.mxu0 0.0
    %106 = vmatpush2.msra.mxu0 0.0
    %107 = vmatprep.subr.mxu0 0.0
    %108 = vmatpush2.msra.mxu0 0.0
    %109 = vmatprep.subr.mxu0 0.0
    %110 = vmatpush2.msra.mxu0 0.0
    %111 = vmatprep.subr.mxu0 0.0
    %112 = vmatpush2.msra.mxu0 0.0
    %113 = vmatprep.subr.mxu0 0.0
    %114 = vmatpush2.msra.mxu0 0.0
    %115 = vmatprep.subr.mxu0 0.0
    %116 = vmatpush2.msra.mxu0 0.0
    %117 = vmatprep.subr.mxu0 0.0
    %118 = vmatpush2.msra.mxu0 0.0
    %119 = vmatprep.subr.mxu0 0.0
    %120 = vmatpush2.msra.mxu0 0.0
    %121 = vmatprep.subr.mxu0 0.0
    %122 = vmatpush2.msra.mxu0 0.0
    %123 = vmatprep.subr.mxu0 0.0
    %124 = vmatpush2.msra.mxu0 0.0
    %125 = vmatprep.subr.mxu0 0.0
    %126 = vmatpush2.msra.mxu0 0.0
    %127 = vmatprep.subr.mxu0 0.0
    %128 = vmatpush2.msra.mxu0 0.0
    %129 = vmatprep.subr.mxu0 0.0
    %130 = vmatpush2.msra.mxu0 0.0
    %131 = vmatprep.subr.mxu0 0.0
    %132 = vmatpush2.msra.mxu0 0.0
    %133 = vmatprep.mubr.f32.mxu0 0.0
    %134 = vmatmul.mubr.f32.gmra.mxu0 %v64
    %v135 = vpop.f32.mrf.mxu0
    %v136 = vadd.f32 %v55, %v135
    %v137 = vpop.f32.mrf.mxu0
    %v138 = vadd.f32 %v59, %v137
    %139 = vmatprep.mubr.f32.mxu0 0.0
    %140 = vmatmul.mubr.f32.gmra.mxu0 %v67
    %v141 = vpop.f32.mrf.mxu0
    %v142 = vadd.f32 %v55, %v141
    %v143 = vpop.f32.mrf.mxu0
    %v144 = vadd.f32 %v59, %v143
    %145 = vdwg.mxu0
    %146 = vst [vmem:[#allocation2] sm:$0xff] %v136
    %147 = vst [vmem:[#allocation2 + $0x8] sm:$0xff] %v138
    %148 = vst [vmem:[#allocation2 + $0x10] sm:$0xff] %v142
    %149 = vst [vmem:[#allocation2 + $0x18] sm:$0xff] %v144
    %v150 = vld [vmem:[#allocation2] sm:$0x3]
    %v151 = vld [vmem:[#allocation2 + $0x8] sm:$0x3]
    %v152 = vld [vmem:[#allocation3] sm:$0xff]
    %v153 = vld [vmem:[#allocation3 + $0x8] sm:$0xff]
    %v154 = vld [vmem:[#allocation3 + $0x10] sm:$0xff]
    %v155 = vld [vmem:[#allocation3 + $0x18] sm:$0xff]
    %v156 = vld [vmem:[#allocation3 + $0x20] sm:$0xff]
    %v157 = vld [vmem:[#allocation3 + $0x28] sm:$0xff]
    %v158 = vld [vmem:[#allocation3 + $0x30] sm:$0xff]
    %v159 = vld [vmem:[#allocation3 + $0x38] sm:$0xff]
    %v160 = vld [vmem:[#allocation3 + $0x40] sm:$0xff]
    %v161 = vld [vmem:[#allocation3 + $0x48] sm:$0xff]
    %v162 = vld [vmem:[#allocation3 + $0x50] sm:$0xff]
    %v163 = vld [vmem:[#allocation3 + $0x58] sm:$0xff]
    %v164 = vld [vmem:[#allocation3 + $0x60] sm:$0xff]
    %v165 = vld [vmem:[#allocation3 + $0x68] sm:$0xff]
    %v166 = vld [vmem:[#allocation3 + $0x70] sm:$0xff]
    %v167 = vld [vmem:[#allocation3 + $0x78] sm:$0xff]
    %v169 = vsel %vm62, 0.0, 0
    %171 = vmatprep.subr.mxu0 0.0
    %172 = vmatpush1.msra.mxu0 0.0
    %173 = vmatprep.subr.mxu0 0.0
    %174 = vmatpush1.msra.mxu0 0.0
    %175 = vmatprep.subr.mxu0 0.0
    %176 = vmatpush1.msra.mxu0 0.0
    %177 = vmatprep.subr.mxu0 0.0
    %178 = vmatpush1.msra.mxu0 0.0
    %179 = vmatprep.subr.mxu0 0.0
    %180 = vmatpush1.msra.mxu0 0.0
    %181 = vmatprep.subr.mxu0 0.0
    %182 = vmatpush1.msra.mxu0 0.0
    %183 = vmatprep.subr.mxu0 0.0
    %184 = vmatpush1.msra.mxu0 0.0
    %185 = vmatprep.subr.mxu0 0.0
    %186 = vmatpush1.msra.mxu0 0.0
    %187 = vmatprep.subr.mxu0 %v167
    %188 = vmatpush1.msra.mxu0 %v166
    %189 = vmatprep.subr.mxu0 %v165
    %190 = vmatpush1.msra.mxu0 %v164
    %191 = vmatprep.subr.mxu0 %v163
    %192 = vmatpush1.msra.mxu0 %v162
    %193 = vmatprep.subr.mxu0 %v161
    %194 = vmatpush1.msra.mxu0 %v160
    %195 = vmatprep.subr.mxu0 %v159
    %196 = vmatpush1.msra.mxu0 %v158
    %197 = vmatprep.subr.mxu0 %v157
    %198 = vmatpush1.msra.mxu0 %v156
    %199 = vmatprep.subr.mxu0 %v155
    %200 = vmatpush1.msra.mxu0 %v154
    %201 = vmatprep.subr.mxu0 %v153
    %202 = vmatpush1.msra.mxu0 %v152
    %203 = vmatprep.subr.mxu0 0.0
    %204 = vmatpush2.msra.mxu0 0.0
    %205 = vmatprep.subr.mxu0 0.0
    %206 = vmatpush2.msra.mxu0 0.0
    %207 = vmatprep.subr.mxu0 0.0
    %208 = vmatpush2.msra.mxu0 0.0
    %209 = vmatprep.subr.mxu0 0.0
    %210 = vmatpush2.msra.mxu0 0.0
    %211 = vmatprep.subr.mxu0 0.0
    %212 = vmatpush2.msra.mxu0 0.0
    %213 = vmatprep.subr.mxu0 0.0
    %214 = vmatpush2.msra.mxu0 0.0
    %215 = vmatprep.subr.mxu0 0.0
    %216 = vmatpush2.msra.mxu0 0.0
    %217 = vmatprep.subr.mxu0 0.0
    %218 = vmatpush2.msra.mxu0 0.0
    %219 = vmatprep.subr.mxu0 0.0
    %220 = vmatpush2.msra.mxu0 0.0
    %221 = vmatprep.subr.mxu0 0.0
    %222 = vmatpush2.msra.mxu0 0.0
    %223 = vmatprep.subr.mxu0 0.0
    %224 = vmatpush2.msra.mxu0 0.0
    %225 = vmatprep.subr.mxu0 0.0
    %226 = vmatpush2.msra.mxu0 0.0
    %227 = vmatprep.subr.mxu0 0.0
    %228 = vmatpush2.msra.mxu0 0.0
    %229 = vmatprep.subr.mxu0 0.0
    %230 = vmatpush2.msra.mxu0 0.0
    %231 = vmatprep.subr.mxu0 0.0
    %232 = vmatpush2.msra.mxu0 0.0
    %233 = vmatprep.subr.mxu0 0.0
    %234 = vmatpush2.msra.mxu0 0.0
    %235 = vmatprep.mubr.f32.mxu0 0.0
    %236 = vmatmul.mubr.f32.gmra.mxu0 %v169
    %v237 = vpop.f32.mrf.mxu0
    %v238 = vadd.f32 0.0, %v237
    %v239 = vpop.f32.mrf.mxu0
    %v240 = vadd.f32 0.0, %v239
    %241 = vdwg.mxu0
    %v242 = vadd.f32 %v150, %v238
    %v243 = vadd.f32 %v151, %v240
    %v244 = vxor.u32 %v242, 2147483648
    %v245 = vmul.f32 %v244, 1.442695
    %v246 = vpow.pop %v245
    %v247 = vadd.f32 %v246, 1.0
    %v248 = vrcp.pop %v247
    %v249 = vmul.f32 1.0, %v248
    %v250 = vtanh.pop %v243
    %v251 = vxor.u32 %v243, 2147483648
    %v252 = vmul.f32 %v251, 1.442695
    %v253 = vpow.pop %v252
    %v254 = vadd.f32 %v253, 1.0
    %v255 = vrcp.pop %v254
    %v256 = vmul.f32 1.0, %v255
    %v257 = vmul.f32 %v249, 0.0
    %v258 = vmul.f32 %v249, %v250
    %260 = vrot.lane.b32.xlu0 %v258, 64
    %v261 = vpop.permute.xlu0 %260
    %v263 = vadd.f32 %v257, %v261
    %v264 = vtanh.pop %v263
    %v265 = vmul.f32 %v256, %v264
    %v266 = vld [vmem:[#allocation2] sm:$0xc]
    %v267 = vld [vmem:[#allocation2 + $0x8] sm:$0xc]
    %269 = vrot.lane.b32.xlu0 %v265, 64
    %v270 = vpop.permute.xlu0 %269
    %v271 = vsel %vm62, %v270, 0
    %273 = vmatprep.subr.mxu0 0.0
    %274 = vmatpush1.msra.mxu0 0.0
    %275 = vmatprep.subr.mxu0 0.0
    %276 = vmatpush1.msra.mxu0 0.0
    %277 = vmatprep.subr.mxu0 0.0
    %278 = vmatpush1.msra.mxu0 0.0
    %279 = vmatprep.subr.mxu0 0.0
    %280 = vmatpush1.msra.mxu0 0.0
    %281 = vmatprep.subr.mxu0 0.0
    %282 = vmatpush1.msra.mxu0 0.0
    %283 = vmatprep.subr.mxu0 0.0
    %284 = vmatpush1.msra.mxu0 0.0
    %285 = vmatprep.subr.mxu0 0.0
    %286 = vmatpush1.msra.mxu0 0.0
    %287 = vmatprep.subr.mxu0 0.0
    %288 = vmatpush1.msra.mxu0 0.0
    %289 = vmatprep.subr.mxu0 %v167
    %290 = vmatpush1.msra.mxu0 %v166
    %291 = vmatprep.subr.mxu0 %v165
    %292 = vmatpush1.msra.mxu0 %v164
    %293 = vmatprep.subr.mxu0 %v163
    %294 = vmatpush1.msra.mxu0 %v162
    %295 = vmatprep.subr.mxu0 %v161
    %296 = vmatpush1.msra.mxu0 %v160
    %297 = vmatprep.subr.mxu0 %v159
    %298 = vmatpush1.msra.mxu0 %v158
    %299 = vmatprep.subr.mxu0 %v157
    %300 = vmatpush1.msra.mxu0 %v156
    %301 = vmatprep.subr.mxu0 %v155
    %302 = vmatpush1.msra.mxu0 %v154
    %303 = vmatprep.subr.mxu0 %v153
    %304 = vmatpush1.msra.mxu0 %v152
    %305 = vmatprep.subr.mxu0 0.0
    %306 = vmatpush2.msra.mxu0 0.0
    %307 = vmatprep.subr.mxu0 0.0
    %308 = vmatpush2.msra.mxu0 0.0
    %309 = vmatprep.subr.mxu0 0.0
    %310 = vmatpush2.msra.mxu0 0.0
    %311 = vmatprep.subr.mxu0 0.0
    %312 = vmatpush2.msra.mxu0 0.0
    %313 = vmatprep.subr.mxu0 0.0
    %314 = vmatpush2.msra.mxu0 0.0
    %315 = vmatprep.subr.mxu0 0.0
    %316 = vmatpush2.msra.mxu0 0.0
    %317 = vmatprep.subr.mxu0 0.0
    %318 = vmatpush2.msra.mxu0 0.0
    %319 = vmatprep.subr.mxu0 0.0
    %320 = vmatpush2.msra.mxu0 0.0
    %321 = vmatprep.subr.mxu0 0.0
    %322 = vmatpush2.msra.mxu0 0.0
    %323 = vmatprep.subr.mxu0 0.0
    %324 = vmatpush2.msra.mxu0 0.0
    %325 = vmatprep.subr.mxu0 0.0
    %326 = vmatpush2.msra.mxu0 0.0
    %327 = vmatprep.subr.mxu0 0.0
    %328 = vmatpush2.msra.mxu0 0.0
    %329 = vmatprep.subr.mxu0 0.0
    %330 = vmatpush2.msra.mxu0 0.0
    %331 = vmatprep.subr.mxu0 0.0
    %332 = vmatpush2.msra.mxu0 0.0
    %333 = vmatprep.subr.mxu0 0.0
    %334 = vmatpush2.msra.mxu0 0.0
    %335 = vmatprep.subr.mxu0 0.0
    %336 = vmatpush2.msra.mxu0 0.0
    %337 = vmatprep.mubr.f32.mxu0 0.0
    %338 = vmatmul.mubr.f32.gmra.mxu0 %v271
    %v339 = vpop.f32.mrf.mxu0
    %v340 = vadd.f32 0.0, %v339
    %v341 = vpop.f32.mrf.mxu0
    %v342 = vadd.f32 0.0, %v341
    %343 = vdwg.mxu0
    %v346 = vrot.slane %v340, 6
    %v347 = vrot.slane %v342, 6
    %v350 = vadd.f32 %v266, %v346
    %v351 = vadd.f32 %v267, %v347
    %v352 = vxor.u32 %v350, 2147483648
    %v353 = vmul.f32 %v352, 1.442695
    %v354 = vpow.pop %v353
    %v355 = vadd.f32 %v354, 1.0
    %v356 = vrcp.pop %v355
    %v357 = vmul.f32 1.0, %v356
    %v358 = vtanh.pop %v351
    %v359 = vxor.u32 %v351, 2147483648
    %v360 = vmul.f32 %v359, 1.442695
    %v361 = vpow.pop %v360
    %v362 = vadd.f32 %v361, 1.0
    %v363 = vrcp.pop %v362
    %v364 = vmul.f32 1.0, %v363
    %v366 = vrot.slane %v263, 6
    %v368 = vmul.f32 %v357, %v366
    %v369 = vmul.f32 %v357, %v358
    %371 = vrot.lane.b32.xlu0 %v369, 64
    %v372 = vpop.permute.xlu0 %371
    %v374 = vadd.f32 %v368, %v372
    %v375 = vtanh.pop %v374
    %v376 = vmul.f32 %v364, %v375
    %v377 = vld [vmem:[#allocation2] sm:$0x30]
    %v378 = vld [vmem:[#allocation2 + $0x8] sm:$0x30]
    %v380 = vrot.slane %v376, 2
    %381 = vrot.lane.b32.xlu0 %v380, 64
    %v382 = vpop.permute.xlu0 %381
    %v383 = vsel %vm62, %v382, 0
    %385 = vmatprep.subr.mxu0 0.0
    %386 = vmatpush1.msra.mxu0 0.0
    %387 = vmatprep.subr.mxu0 0.0
    %388 = vmatpush1.msra.mxu0 0.0
    %389 = vmatprep.subr.mxu0 0.0
    %390 = vmatpush1.msra.mxu0 0.0
    %391 = vmatprep.subr.mxu0 0.0
    %392 = vmatpush1.msra.mxu0 0.0
    %393 = vmatprep.subr.mxu0 0.0
    %394 = vmatpush1.msra.mxu0 0.0
    %395 = vmatprep.subr.mxu0 0.0
    %396 = vmatpush1.msra.mxu0 0.0
    %397 = vmatprep.subr.mxu0 0.0
    %398 = vmatpush1.msra.mxu0 0.0
    %399 = vmatprep.subr.mxu0 0.0
    %400 = vmatpush1.msra.mxu0 0.0
    %401 = vmatprep.subr.mxu0 %v167
    %402 = vmatpush1.msra.mxu0 %v166
    %403 = vmatprep.subr.mxu0 %v165
    %404 = vmatpush1.msra.mxu0 %v164
    %405 = vmatprep.subr.mxu0 %v163
    %406 = vmatpush1.msra.mxu0 %v162
    %407 = vmatprep.subr.mxu0 %v161
    %408 = vmatpush1.msra.mxu0 %v160
    %409 = vmatprep.subr.mxu0 %v159
    %410 = vmatpush1.msra.mxu0 %v158
    %411 = vmatprep.subr.mxu0 %v157
    %412 = vmatpush1.msra.mxu0 %v156
    %413 = vmatprep.subr.mxu0 %v155
    %414 = vmatpush1.msra.mxu0 %v154
    %415 = vmatprep.subr.mxu0 %v153
    %416 = vmatpush1.msra.mxu0 %v152
    %417 = vmatprep.subr.mxu0 0.0
    %418 = vmatpush2.msra.mxu0 0.0
    %419 = vmatprep.subr.mxu0 0.0
    %420 = vmatpush2.msra.mxu0 0.0
    %421 = vmatprep.subr.mxu0 0.0
    %422 = vmatpush2.msra.mxu0 0.0
    %423 = vmatprep.subr.mxu0 0.0
    %424 = vmatpush2.msra.mxu0 0.0
    %425 = vmatprep.subr.mxu0 0.0
    %426 = vmatpush2.msra.mxu0 0.0
    %427 = vmatprep.subr.mxu0 0.0
    %428 = vmatpush2.msra.mxu0 0.0
    %429 = vmatprep.subr.mxu0 0.0
    %430 = vmatpush2.msra.mxu0 0.0
    %431 = vmatprep.subr.mxu0 0.0
    %432 = vmatpush2.msra.mxu0 0.0
    %433 = vmatprep.subr.mxu0 0.0
    %434 = vmatpush2.msra.mxu0 0.0
    %435 = vmatprep.subr.mxu0 0.0
    %436 = vmatpush2.msra.mxu0 0.0
    %437 = vmatprep.subr.mxu0 0.0
    %438 = vmatpush2.msra.mxu0 0.0
    %439 = vmatprep.subr.mxu0 0.0
    %440 = vmatpush2.msra.mxu0 0.0
    %441 = vmatprep.subr.mxu0 0.0
    %442 = vmatpush2.msra.mxu0 0.0
    %443 = vmatprep.subr.mxu0 0.0
    %444 = vmatpush2.msra.mxu0 0.0
    %445 = vmatprep.subr.mxu0 0.0
    %446 = vmatpush2.msra.mxu0 0.0
    %447 = vmatprep.subr.mxu0 0.0
    %448 = vmatpush2.msra.mxu0 0.0
    %449 = vmatprep.mubr.f32.mxu0 0.0
    %450 = vmatmul.mubr.f32.gmra.mxu0 %v383
    %v451 = vpop.f32.mrf.mxu0
    %v452 = vadd.f32 0.0, %v451
    %v453 = vpop.f32.mrf.mxu0
    %v454 = vadd.f32 0.0, %v453
    %455 = vdwg.mxu0
    %v458 = vrot.slane %v452, 4
    %v459 = vrot.slane %v454, 4
    %v462 = vadd.f32 %v377, %v458
    %v463 = vadd.f32 %v378, %v459
    %v464 = vxor.u32 %v462, 2147483648
    %v465 = vmul.f32 %v464, 1.442695
    %v466 = vpow.pop %v465
    %v467 = vadd.f32 %v466, 1.0
    %v468 = vrcp.pop %v467
    %v469 = vmul.f32 1.0, %v468
    %v470 = vtanh.pop %v463
    %v471 = vxor.u32 %v463, 2147483648
    %v472 = vmul.f32 %v471, 1.442695
    %v473 = vpow.pop %v472
    %v474 = vadd.f32 %v473, 1.0
    %v475 = vrcp.pop %v474
    %v476 = vmul.f32 1.0, %v475
    %v478 = vrot.slane %v374, 6
    %v480 = vmul.f32 %v469, %v478
    %v481 = vmul.f32 %v469, %v470
    %483 = vrot.lane.b32.xlu0 %v481, 64
    %v484 = vpop.permute.xlu0 %483
    %v486 = vadd.f32 %v480, %v484
    %v487 = vtanh.pop %v486
    %v488 = vmul.f32 %v476, %v487
    %v489 = vld [vmem:[#allocation2] sm:$0xc0]
    %v490 = vld [vmem:[#allocation2 + $0x8] sm:$0xc0]
    %v492 = vrot.slane %v488, 4
    %493 = vrot.lane.b32.xlu0 %v492, 64
    %v494 = vpop.permute.xlu0 %493
    %v495 = vsel %vm62, %v494, 0
    %497 = vmatprep.subr.mxu0 0.0
    %498 = vmatpush1.msra.mxu0 0.0
    %499 = vmatprep.subr.mxu0 0.0
    %500 = vmatpush1.msra.mxu0 0.0
    %501 = vmatprep.subr.mxu0 0.0
    %502 = vmatpush1.msra.mxu0 0.0
    %503 = vmatprep.subr.mxu0 0.0
    %504 = vmatpush1.msra.mxu0 0.0
    %505 = vmatprep.subr.mxu0 0.0
    %506 = vmatpush1.msra.mxu0 0.0
    %507 = vmatprep.subr.mxu0 0.0
    %508 = vmatpush1.msra.mxu0 0.0
    %509 = vmatprep.subr.mxu0 0.0
    %510 = vmatpush1.msra.mxu0 0.0
    %511 = vmatprep.subr.mxu0 0.0
    %512 = vmatpush1.msra.mxu0 0.0
    %513 = vmatprep.subr.mxu0 %v167
    %514 = vmatpush1.msra.mxu0 %v166
    %515 = vmatprep.subr.mxu0 %v165
    %516 = vmatpush1.msra.mxu0 %v164
    %517 = vmatprep.subr.mxu0 %v163
    %518 = vmatpush1.msra.mxu0 %v162
    %519 = vmatprep.subr.mxu0 %v161
    %520 = vmatpush1.msra.mxu0 %v160
    %521 = vmatprep.subr.mxu0 %v159
    %522 = vmatpush1.msra.mxu0 %v158
    %523 = vmatprep.subr.mxu0 %v157
    %524 = vmatpush1.msra.mxu0 %v156
    %525 = vmatprep.subr.mxu0 %v155
    %526 = vmatpush1.msra.mxu0 %v154
    %527 = vmatprep.subr.mxu0 %v153
    %528 = vmatpush1.msra.mxu0 %v152
    %529 = vmatprep.subr.mxu0 0.0
    %530 = vmatpush2.msra.mxu0 0.0
    %531 = vmatprep.subr.mxu0 0.0
    %532 = vmatpush2.msra.mxu0 0.0
    %533 = vmatprep.subr.mxu0 0.0
    %534 = vmatpush2.msra.mxu0 0.0
    %535 = vmatprep.subr.mxu0 0.0
    %536 = vmatpush2.msra.mxu0 0.0
    %537 = vmatprep.subr.mxu0 0.0
    %538 = vmatpush2.msra.mxu0 0.0
    %539 = vmatprep.subr.mxu0 0.0
    %540 = vmatpush2.msra.mxu0 0.0
    %541 = vmatprep.subr.mxu0 0.0
    %542 = vmatpush2.msra.mxu0 0.0
    %543 = vmatprep.subr.mxu0 0.0
    %544 = vmatpush2.msra.mxu0 0.0
    %545 = vmatprep.subr.mxu0 0.0
    %546 = vmatpush2.msra.mxu0 0.0
    %547 = vmatprep.subr.mxu0 0.0
    %548 = vmatpush2.msra.mxu0 0.0
    %549 = vmatprep.subr.mxu0 0.0
    %550 = vmatpush2.msra.mxu0 0.0
    %551 = vmatprep.subr.mxu0 0.0
    %552 = vmatpush2.msra.mxu0 0.0
    %553 = vmatprep.subr.mxu0 0.0
    %554 = vmatpush2.msra.mxu0 0.0
    %555 = vmatprep.subr.mxu0 0.0
    %556 = vmatpush2.msra.mxu0 0.0
    %557 = vmatprep.subr.mxu0 0.0
    %558 = vmatpush2.msra.mxu0 0.0
    %559 = vmatprep.subr.mxu0 0.0
    %560 = vmatpush2.msra.mxu0 0.0
    %561 = vmatprep.mubr.f32.mxu0 0.0
    %562 = vmatmul.mubr.f32.gmra.mxu0 %v495
    %v563 = vpop.f32.mrf.mxu0
    %v564 = vadd.f32 0.0, %v563
    %v565 = vpop.f32.mrf.mxu0
    %v566 = vadd.f32 0.0, %v565
    %567 = vdwg.mxu0
    %v570 = vrot.slane %v564, 2
    %v571 = vrot.slane %v566, 2
    %v574 = vadd.f32 %v489, %v570
    %v575 = vadd.f32 %v490, %v571
    %v576 = vxor.u32 %v574, 2147483648
    %v577 = vmul.f32 %v576, 1.442695
    %v578 = vpow.pop %v577
    %v579 = vadd.f32 %v578, 1.0
    %v580 = vrcp.pop %v579
    %v581 = vmul.f32 1.0, %v580
    %v582 = vtanh.pop %v575
    %v583 = vxor.u32 %v575, 2147483648
    %v584 = vmul.f32 %v583, 1.442695
    %v585 = vpow.pop %v584
    %v586 = vadd.f32 %v585, 1.0
    %v587 = vrcp.pop %v586
    %v588 = vmul.f32 1.0, %v587
    %v590 = vrot.slane %v486, 6
    %v592 = vmul.f32 %v581, %v590
    %v593 = vmul.f32 %v581, %v582
    %595 = vrot.lane.b32.xlu0 %v593, 64
    %v596 = vpop.permute.xlu0 %595
    %v598 = vadd.f32 %v592, %v596
    %v599 = vtanh.pop %v598
    %v600 = vmul.f32 %v588, %v599
    %v601 = vld [vmem:[#allocation2 + $0x10] sm:$0x3]
    %v602 = vld [vmem:[#allocation2 + $0x18] sm:$0x3]
    %v604 = vrot.slane %v600, 6
    %605 = vrot.lane.b32.xlu0 %v604, 64
    %v606 = vpop.permute.xlu0 %605
    %v607 = vsel %vm62, %v606, 0
    %609 = vmatprep.subr.mxu0 0.0
    %610 = vmatpush1.msra.mxu0 0.0
    %611 = vmatprep.subr.mxu0 0.0
    %612 = vmatpush1.msra.mxu0 0.0
    %613 = vmatprep.subr.mxu0 0.0
    %614 = vmatpush1.msra.mxu0 0.0
    %615 = vmatprep.subr.mxu0 0.0
    %616 = vmatpush1.msra.mxu0 0.0
    %617 = vmatprep.subr.mxu0 0.0
    %618 = vmatpush1.msra.mxu0 0.0
    %619 = vmatprep.subr.mxu0 0.0
    %620 = vmatpush1.msra.mxu0 0.0
    %621 = vmatprep.subr.mxu0 0.0
    %622 = vmatpush1.msra.mxu0 0.0
    %623 = vmatprep.subr.mxu0 0.0
    %624 = vmatpush1.msra.mxu0 0.0
    %625 = vmatprep.subr.mxu0 %v167
    %626 = vmatpush1.msra.mxu0 %v166
    %627 = vmatprep.subr.mxu0 %v165
    %628 = vmatpush1.msra.mxu0 %v164
    %629 = vmatprep.subr.mxu0 %v163
    %630 = vmatpush1.msra.mxu0 %v162
    %631 = vmatprep.subr.mxu0 %v161
    %632 = vmatpush1.msra.mxu0 %v160
    %633 = vmatprep.subr.mxu0 %v159
    %634 = vmatpush1.msra.mxu0 %v158
    %635 = vmatprep.subr.mxu0 %v157
    %636 = vmatpush1.msra.mxu0 %v156
    %637 = vmatprep.subr.mxu0 %v155
    %638 = vmatpush1.msra.mxu0 %v154
    %639 = vmatprep.subr.mxu0 %v153
    %640 = vmatpush1.msra.mxu0 %v152
    %641 = vmatprep.subr.mxu0 0.0
    %642 = vmatpush2.msra.mxu0 0.0
    %643 = vmatprep.subr.mxu0 0.0
    %644 = vmatpush2.msra.mxu0 0.0
    %645 = vmatprep.subr.mxu0 0.0
    %646 = vmatpush2.msra.mxu0 0.0
    %647 = vmatprep.subr.mxu0 0.0
    %648 = vmatpush2.msra.mxu0 0.0
    %649 = vmatprep.subr.mxu0 0.0
    %650 = vmatpush2.msra.mxu0 0.0
    %651 = vmatprep.subr.mxu0 0.0
    %652 = vmatpush2.msra.mxu0 0.0
    %653 = vmatprep.subr.mxu0 0.0
    %654 = vmatpush2.msra.mxu0 0.0
    %655 = vmatprep.subr.mxu0 0.0
    %656 = vmatpush2.msra.mxu0 0.0
    %657 = vmatprep.subr.mxu0 0.0
    %658 = vmatpush2.msra.mxu0 0.0
    %659 = vmatprep.subr.mxu0 0.0
    %660 = vmatpush2.msra.mxu0 0.0
    %661 = vmatprep.subr.mxu0 0.0
    %662 = vmatpush2.msra.mxu0 0.0
    %663 = vmatprep.subr.mxu0 0.0
    %664 = vmatpush2.msra.mxu0 0.0
    %665 = vmatprep.subr.mxu0 0.0
    %666 = vmatpush2.msra.mxu0 0.0
    %667 = vmatprep.subr.mxu0 0.0
    %668 = vmatpush2.msra.mxu0 0.0
    %669 = vmatprep.subr.mxu0 0.0
    %670 = vmatpush2.msra.mxu0 0.0
    %671 = vmatprep.subr.mxu0 0.0
    %672 = vmatpush2.msra.mxu0 0.0
    %673 = vmatprep.mubr.f32.mxu0 0.0
    %674 = vmatmul.mubr.f32.gmra.mxu0 %v607
    %v675 = vpop.f32.mrf.mxu0
    %v676 = vadd.f32 0.0, %v675
    %v677 = vpop.f32.mrf.mxu0
    %v678 = vadd.f32 0.0, %v677
    %679 = vdwg.mxu0
    %v680 = vadd.f32 %v601, %v676
    %v681 = vadd.f32 %v602, %v678
    %v682 = vxor.u32 %v680, 2147483648
    %v683 = vmul.f32 %v682, 1.442695
    %v684 = vpow.pop %v683
    %v685 = vadd.f32 %v684, 1.0
    %v686 = vrcp.pop %v685
    %v687 = vmul.f32 1.0, %v686
    %v688 = vtanh.pop %v681
    %v689 = vxor.u32 %v681, 2147483648
    %v690 = vmul.f32 %v689, 1.442695
    %v691 = vpow.pop %v690
    %v692 = vadd.f32 %v691, 1.0
    %v693 = vrcp.pop %v692
    %v694 = vmul.f32 1.0, %v693
    %v696 = vrot.slane %v598, 6
    %v698 = vmul.f32 %v687, %v696
    %v699 = vmul.f32 %v687, %v688
    %701 = vrot.lane.b32.xlu0 %v699, 64
    %v702 = vpop.permute.xlu0 %701
    %v704 = vadd.f32 %v698, %v702
    %v705 = vtanh.pop %v704
    %v706 = vmul.f32 %v694, %v705
    %v707 = vld [vmem:[#allocation2 + $0x10] sm:$0xc]
    %v708 = vld [vmem:[#allocation2 + $0x18] sm:$0xc]
    %710 = vrot.lane.b32.xlu0 %v706, 64
    %v711 = vpop.permute.xlu0 %710
    %v712 = vsel %vm62, %v711, 0
    %714 = vmatprep.subr.mxu0 0.0
    %715 = vmatpush1.msra.mxu0 0.0
    %716 = vmatprep.subr.mxu0 0.0
    %717 = vmatpush1.msra.mxu0 0.0
    %718 = vmatprep.subr.mxu0 0.0
    %719 = vmatpush1.msra.mxu0 0.0
    %720 = vmatprep.subr.mxu0 0.0
    %721 = vmatpush1.msra.mxu0 0.0
    %722 = vmatprep.subr.mxu0 0.0
    %723 = vmatpush1.msra.mxu0 0.0
    %724 = vmatprep.subr.mxu0 0.0
    %725 = vmatpush1.msra.mxu0 0.0
    %726 = vmatprep.subr.mxu0 0.0
    %727 = vmatpush1.msra.mxu0 0.0
    %728 = vmatprep.subr.mxu0 0.0
    %729 = vmatpush1.msra.mxu0 0.0
    %730 = vmatprep.subr.mxu0 %v167
    %731 = vmatpush1.msra.mxu0 %v166
    %732 = vmatprep.subr.mxu0 %v165
    %733 = vmatpush1.msra.mxu0 %v164
    %734 = vmatprep.subr.mxu0 %v163
    %735 = vmatpush1.msra.mxu0 %v162
    %736 = vmatprep.subr.mxu0 %v161
    %737 = vmatpush1.msra.mxu0 %v160
    %738 = vmatprep.subr.mxu0 %v159
    %739 = vmatpush1.msra.mxu0 %v158
    %740 = vmatprep.subr.mxu0 %v157
    %741 = vmatpush1.msra.mxu0 %v156
    %742 = vmatprep.subr.mxu0 %v155
    %743 = vmatpush1.msra.mxu0 %v154
    %744 = vmatprep.subr.mxu0 %v153
    %745 = vmatpush1.msra.mxu0 %v152
    %746 = vmatprep.subr.mxu0 0.0
    %747 = vmatpush2.msra.mxu0 0.0
    %748 = vmatprep.subr.mxu0 0.0
    %749 = vmatpush2.msra.mxu0 0.0
    %750 = vmatprep.subr.mxu0 0.0
    %751 = vmatpush2.msra.mxu0 0.0
    %752 = vmatprep.subr.mxu0 0.0
    %753 = vmatpush2.msra.mxu0 0.0
    %754 = vmatprep.subr.mxu0 0.0
    %755 = vmatpush2.msra.mxu0 0.0
    %756 = vmatprep.subr.mxu0 0.0
    %757 = vmatpush2.msra.mxu0 0.0
    %758 = vmatprep.subr.mxu0 0.0
    %759 = vmatpush2.msra.mxu0 0.0
    %760 = vmatprep.subr.mxu0 0.0
    %761 = vmatpush2.msra.mxu0 0.0
    %762 = vmatprep.subr.mxu0 0.0
    %763 = vmatpush2.msra.mxu0 0.0
    %764 = vmatprep.subr.mxu0 0.0
    %765 = vmatpush2.msra.mxu0 0.0
    %766 = vmatprep.subr.mxu0 0.0
    %767 = vmatpush2.msra.mxu0 0.0
    %768 = vmatprep.subr.mxu0 0.0
    %769 = vmatpush2.msra.mxu0 0.0
    %770 = vmatprep.subr.mxu0 0.0
    %771 = vmatpush2.msra.mxu0 0.0
    %772 = vmatprep.subr.mxu0 0.0
    %773 = vmatpush2.msra.mxu0 0.0
    %774 = vmatprep.subr.mxu0 0.0
    %775 = vmatpush2.msra.mxu0 0.0
    %776 = vmatprep.subr.mxu0 0.0
    %777 = vmatpush2.msra.mxu0 0.0
    %778 = vmatprep.mubr.f32.mxu0 0.0
    %779 = vmatmul.mubr.f32.gmra.mxu0 %v712
    %v780 = vpop.f32.mrf.mxu0
    %v781 = vadd.f32 0.0, %v780
    %v782 = vpop.f32.mrf.mxu0
    %v783 = vadd.f32 0.0, %v782
    %784 = vdwg.mxu0
    %v787 = vrot.slane %v781, 6
    %v788 = vrot.slane %v783, 6
    %v791 = vadd.f32 %v707, %v787
    %v792 = vadd.f32 %v708, %v788
    %v793 = vxor.u32 %v791, 2147483648
    %v794 = vmul.f32 %v793, 1.442695
    %v795 = vpow.pop %v794
    %v796 = vadd.f32 %v795, 1.0
    %v797 = vrcp.pop %v796
    %v798 = vmul.f32 1.0, %v797
    %v799 = vtanh.pop %v792
    %v800 = vxor.u32 %v792, 2147483648
    %v801 = vmul.f32 %v800, 1.442695
    %v802 = vpow.pop %v801
    %v803 = vadd.f32 %v802, 1.0
    %v804 = vrcp.pop %v803
    %v805 = vmul.f32 1.0, %v804
    %v807 = vrot.slane %v704, 6
    %v809 = vmul.f32 %v798, %v807
    %v810 = vmul.f32 %v798, %v799
    %812 = vrot.lane.b32.xlu0 %v810, 64
    %v813 = vpop.permute.xlu0 %812
    %v815 = vadd.f32 %v809, %v813
    %v816 = vtanh.pop %v815
    %v817 = vmul.f32 %v805, %v816
    %v818 = vld [vmem:[#allocation2 + $0x10] sm:$0x30]
    %v819 = vld [vmem:[#allocation2 + $0x18] sm:$0x30]
    %v821 = vrot.slane %v817, 2
    %822 = vrot.lane.b32.xlu0 %v821, 64
    %v823 = vpop.permute.xlu0 %822
    %v824 = vsel %vm62, %v823, 0
    %826 = vmatprep.subr.mxu0 0.0
    %827 = vmatpush1.msra.mxu0 0.0
    %828 = vmatprep.subr.mxu0 0.0
    %829 = vmatpush1.msra.mxu0 0.0
    %830 = vmatprep.subr.mxu0 0.0
    %831 = vmatpush1.msra.mxu0 0.0
    %832 = vmatprep.subr.mxu0 0.0
    %833 = vmatpush1.msra.mxu0 0.0
    %834 = vmatprep.subr.mxu0 0.0
    %835 = vmatpush1.msra.mxu0 0.0
    %836 = vmatprep.subr.mxu0 0.0
    %837 = vmatpush1.msra.mxu0 0.0
    %838 = vmatprep.subr.mxu0 0.0
    %839 = vmatpush1.msra.mxu0 0.0
    %840 = vmatprep.subr.mxu0 0.0
    %841 = vmatpush1.msra.mxu0 0.0
    %842 = vmatprep.subr.mxu0 %v167
    %843 = vmatpush1.msra.mxu0 %v166
    %844 = vmatprep.subr.mxu0 %v165
    %845 = vmatpush1.msra.mxu0 %v164
    %846 = vmatprep.subr.mxu0 %v163
    %847 = vmatpush1.msra.mxu0 %v162
    %848 = vmatprep.subr.mxu0 %v161
    %849 = vmatpush1.msra.mxu0 %v160
    %850 = vmatprep.subr.mxu0 %v159
    %851 = vmatpush1.msra.mxu0 %v158
    %852 = vmatprep.subr.mxu0 %v157
    %853 = vmatpush1.msra.mxu0 %v156
    %854 = vmatprep.subr.mxu0 %v155
    %855 = vmatpush1.msra.mxu0 %v154
    %856 = vmatprep.subr.mxu0 %v153
    %857 = vmatpush1.msra.mxu0 %v152
    %858 = vmatprep.subr.mxu0 0.0
    %859 = vmatpush2.msra.mxu0 0.0
    %860 = vmatprep.subr.mxu0 0.0
    %861 = vmatpush2.msra.mxu0 0.0
    %862 = vmatprep.subr.mxu0 0.0
    %863 = vmatpush2.msra.mxu0 0.0
    %864 = vmatprep.subr.mxu0 0.0
    %865 = vmatpush2.msra.mxu0 0.0
    %866 = vmatprep.subr.mxu0 0.0
    %867 = vmatpush2.msra.mxu0 0.0
    %868 = vmatprep.subr.mxu0 0.0
    %869 = vmatpush2.msra.mxu0 0.0
    %870 = vmatprep.subr.mxu0 0.0
    %871 = vmatpush2.msra.mxu0 0.0
    %872 = vmatprep.subr.mxu0 0.0
    %873 = vmatpush2.msra.mxu0 0.0
    %874 = vmatprep.subr.mxu0 0.0
    %875 = vmatpush2.msra.mxu0 0.0
    %876 = vmatprep.subr.mxu0 0.0
    %877 = vmatpush2.msra.mxu0 0.0
    %878 = vmatprep.subr.mxu0 0.0
    %879 = vmatpush2.msra.mxu0 0.0
    %880 = vmatprep.subr.mxu0 0.0
    %881 = vmatpush2.msra.mxu0 0.0
    %882 = vmatprep.subr.mxu0 0.0
    %883 = vmatpush2.msra.mxu0 0.0
    %884 = vmatprep.subr.mxu0 0.0
    %885 = vmatpush2.msra.mxu0 0.0
    %886 = vmatprep.subr.mxu0 0.0
    %887 = vmatpush2.msra.mxu0 0.0
    %888 = vmatprep.subr.mxu0 0.0
    %889 = vmatpush2.msra.mxu0 0.0
    %890 = vmatprep.mubr.f32.mxu0 0.0
    %891 = vmatmul.mubr.f32.gmra.mxu0 %v824
    %v892 = vpop.f32.mrf.mxu0
    %v893 = vadd.f32 0.0, %v892
    %v894 = vpop.f32.mrf.mxu0
    %v895 = vadd.f32 0.0, %v894
    %896 = vdwg.mxu0
    %v899 = vrot.slane %v893, 4
    %v900 = vrot.slane %v895, 4
    %v903 = vadd.f32 %v818, %v899
    %v904 = vadd.f32 %v819, %v900
    %v905 = vxor.u32 %v903, 2147483648
    %v906 = vmul.f32 %v905, 1.442695
    %v907 = vpow.pop %v906
    %v908 = vadd.f32 %v907, 1.0
    %v909 = vrcp.pop %v908
    %v910 = vmul.f32 1.0, %v909
    %v911 = vtanh.pop %v904
    %v912 = vxor.u32 %v904, 2147483648
    %v913 = vmul.f32 %v912, 1.442695
    %v914 = vpow.pop %v913
    %v915 = vadd.f32 %v914, 1.0
    %v916 = vrcp.pop %v915
    %v917 = vmul.f32 1.0, %v916
    %v919 = vrot.slane %v815, 6
    %v921 = vmul.f32 %v910, %v919
    %v922 = vmul.f32 %v910, %v911
    %924 = vrot.lane.b32.xlu0 %v922, 64
    %v925 = vpop.permute.xlu0 %924
    %v927 = vadd.f32 %v921, %v925
    %v928 = vtanh.pop %v927
    %v929 = vmul.f32 %v917, %v928
    %v930 = vld [vmem:[#allocation2 + $0x10] sm:$0xc0]
    %v931 = vld [vmem:[#allocation2 + $0x18] sm:$0xc0]
    %v933 = vrot.slane %v929, 4
    %934 = vrot.lane.b32.xlu0 %v933, 64
    %v935 = vpop.permute.xlu0 %934
    %v936 = vsel %vm62, %v935, 0
    %938 = vmatprep.subr.mxu0 0.0
    %939 = vmatpush1.msra.mxu0 0.0
    %940 = vmatprep.subr.mxu0 0.0
    %941 = vmatpush1.msra.mxu0 0.0
    %942 = vmatprep.subr.mxu0 0.0
    %943 = vmatpush1.msra.mxu0 0.0
    %944 = vmatprep.subr.mxu0 0.0
    %945 = vmatpush1.msra.mxu0 0.0
    %946 = vmatprep.subr.mxu0 0.0
    %947 = vmatpush1.msra.mxu0 0.0
    %948 = vmatprep.subr.mxu0 0.0
    %949 = vmatpush1.msra.mxu0 0.0
    %950 = vmatprep.subr.mxu0 0.0
    %951 = vmatpush1.msra.mxu0 0.0
    %952 = vmatprep.subr.mxu0 0.0
    %953 = vmatpush1.msra.mxu0 0.0
    %954 = vmatprep.subr.mxu0 %v167
    %955 = vmatpush1.msra.mxu0 %v166
    %956 = vmatprep.subr.mxu0 %v165
    %957 = vmatpush1.msra.mxu0 %v164
    %958 = vmatprep.subr.mxu0 %v163
    %959 = vmatpush1.msra.mxu0 %v162
    %960 = vmatprep.subr.mxu0 %v161
    %961 = vmatpush1.msra.mxu0 %v160
    %962 = vmatprep.subr.mxu0 %v159
    %963 = vmatpush1.msra.mxu0 %v158
    %964 = vmatprep.subr.mxu0 %v157
    %965 = vmatpush1.msra.mxu0 %v156
    %966 = vmatprep.subr.mxu0 %v155
    %967 = vmatpush1.msra.mxu0 %v154
    %968 = vmatprep.subr.mxu0 %v153
    %969 = vmatpush1.msra.mxu0 %v152
    %970 = vmatprep.subr.mxu0 0.0
    %971 = vmatpush2.msra.mxu0 0.0
    %972 = vmatprep.subr.mxu0 0.0
    %973 = vmatpush2.msra.mxu0 0.0
    %974 = vmatprep.subr.mxu0 0.0
    %975 = vmatpush2.msra.mxu0 0.0
    %976 = vmatprep.subr.mxu0 0.0
    %977 = vmatpush2.msra.mxu0 0.0
    %978 = vmatprep.subr.mxu0 0.0
    %979 = vmatpush2.msra.mxu0 0.0
    %980 = vmatprep.subr.mxu0 0.0
    %981 = vmatpush2.msra.mxu0 0.0
    %982 = vmatprep.subr.mxu0 0.0
    %983 = vmatpush2.msra.mxu0 0.0
    %984 = vmatprep.subr.mxu0 0.0
    %985 = vmatpush2.msra.mxu0 0.0
    %986 = vmatprep.subr.mxu0 0.0
    %987 = vmatpush2.msra.mxu0 0.0
    %988 = vmatprep.subr.mxu0 0.0
    %989 = vmatpush2.msra.mxu0 0.0
    %990 = vmatprep.subr.mxu0 0.0
    %991 = vmatpush2.msra.mxu0 0.0
    %992 = vmatprep.subr.mxu0 0.0
    %993 = vmatpush2.msra.mxu0 0.0
    %994 = vmatprep.subr.mxu0 0.0
    %995 = vmatpush2.msra.mxu0 0.0
    %996 = vmatprep.subr.mxu0 0.0
    %997 = vmatpush2.msra.mxu0 0.0
    %998 = vmatprep.subr.mxu0 0.0
    %999 = vmatpush2.msra.mxu0 0.0
    %1000 = vmatprep.subr.mxu0 0.0
    %1001 = vmatpush2.msra.mxu0 0.0
    %1002 = vmatprep.mubr.f32.mxu0 0.0
    %1003 = vmatmul.mubr.f32.gmra.mxu0 %v936
    %v1004 = vpop.f32.mrf.mxu0
    %v1005 = vadd.f32 0.0, %v1004
    %v1006 = vpop.f32.mrf.mxu0
    %v1007 = vadd.f32 0.0, %v1006
    %1008 = vdwg.mxu0
    %v1011 = vrot.slane %v1005, 2
    %v1012 = vrot.slane %v1007, 2
    %v1015 = vadd.f32 %v930, %v1011
    %v1016 = vadd.f32 %v931, %v1012
    %v1017 = vxor.u32 %v1015, 2147483648
    %v1018 = vmul.f32 %v1017, 1.442695
    %v1019 = vpow.pop %v1018
    %v1020 = vadd.f32 %v1019, 1.0
    %v1021 = vrcp.pop %v1020
    %v1022 = vmul.f32 1.0, %v1021
    %v1023 = vtanh.pop %v1016
    %v1024 = vxor.u32 %v1016, 2147483648
    %v1025 = vmul.f32 %v1024, 1.442695
    %v1026 = vpow.pop %v1025
    %v1027 = vadd.f32 %v1026, 1.0
    %v1028 = vrcp.pop %v1027
    %v1029 = vmul.f32 1.0, %v1028
    %v1031 = vrot.slane %v927, 6
    %v1033 = vmul.f32 %v1022, %v1031
    %v1034 = vmul.f32 %v1022, %v1023
    %1036 = vrot.lane.b32.xlu0 %v1034, 64
    %v1037 = vpop.permute.xlu0 %1036
    %v1039 = vadd.f32 %v1033, %v1037
    %v1040 = vtanh.pop %v1039
    %v1041 = vmul.f32 %v1029, %v1040
    %1043 = vrot.lane.b32.xlu0 %v1041, 64
    %v1044 = vpop.permute.xlu0 %1043
    %vm1046 = vcmask 523270
    %1047 = vst.msk [vmem:[#allocation6 - $0x6] sm:$0xc0] %vm1046, %v1044
    // Predicated region
    $region22: #{inst_encoder_forward.1} parent=1 // pred_check
      _
    $region23: #{inst_encoder_forward.1} parent=1 // pred_check_branch
      %1049 = sbr.rel (0) target = $region25
    $region24: #{inst_encoder_forward.1} parent=1 // pred_region
      %s1051 = ssub.s32 32, 32
      %1052 = vsyncadd [#allocation5], %s1051
      %s1054 = sshll.u32 [#allocation6], 4
      %s1055 = int_to_ptr.vmem [resolvable:$true] %s1054
      %1057 = dma.vmem_to_hbm [thread:$0]  %s1055, 32, %s4, [#allocation5]
    $region25: #{inst_encoder_forward.1} parent=1 // pred_fallthru
      _
    // Predicated region
    $region26: #{inst_encoder_forward.1} parent=1 // pred_check
      _
    $region27: #{inst_encoder_forward.1} parent=1 // pred_check_branch
      %1059 = sbr.rel (0) target = $region29
    $region28: #{inst_encoder_forward.1} parent=1 // pred_region
      %1060 = dma.done [#allocation5], 32
    $region29: #{inst_encoder_forward.1} parent=1 // pred_fallthru
      _
    %1061 = vsyncpa [#allocation4], 1
    %1062 = vsyncpa [#allocation5], 1

</llo_original>
